<compile_context>
chip_gen: v6e
topology: v6e:2x2x1
jax: 0.10.0
libtpu: 0.0.40
codegen_flags: <defaults>
</compile_context>

<pallas_src>
import jax
import jax.numpy as jnp
from jax import lax
from jax.experimental import pallas as pl
from jax.experimental.pallas import tpu as pltpu


def _round_up(x, m):
    return (x + m - 1) // m * m


def mfc_kernel(x_ref, w_ref, scale_ref, bias_ref, o_ref):
    """One (tb, tn) output tile: full-K MXU matmul + fused BN epilogue."""
    acc = jnp.dot(x_ref[...], w_ref[...], preferred_element_type=jnp.float32)
    # BatchNorm1d (eval) + Linear bias fused into an affine epilogue:
    #   BN(x@W + b) == (x@W) * scale + (b*scale + beta - mean*scale)
    o_ref[...] = (acc * scale_ref[...] + bias_ref[...]).astype(o_ref.dtype)


def _pick_tn(out_dim, tn_req):
    """Largest legal N tile <= tn_req, avoiding N padding when possible."""
    tn_req = max(128, _round_up(tn_req, 128))
    if out_dim <= tn_req:
        return out_dim, out_dim                    # one full-width block, no pad
    for cand in range(tn_req, 127, -128):
        if out_dim % cand == 0:
            return cand, out_dim                   # exact 128-multiple divisor
    return tn_req, _round_up(out_dim, tn_req)      # fallback: pad along N


def _vmem_capacity_bytes():
    try:
        return int(pltpu.get_tpu_info().vmem_capacity_bytes)
    except Exception:
        return 64 << 20                            # v7x-safe fallback


def mfc_forward(x, w, b, gamma, beta, running_mean, running_var,
                *, eps=1e-5, tb=1024, tn=512, compute_dtype=jnp.bfloat16):
    """x: (B, in_dim); w: (in_dim, out_dim); b/gamma/beta/mean/var: (out_dim,).

    compute_dtype=jnp.bfloat16 (default) is the inference fast path; pass
    jnp.float32 (or None to reuse the input dtype) for full-precision compute.
    The BN epilogue and MXU accumulation are always f32.
    """
    B, in_dim = x.shape
    K, out_dim = w.shape
    assert K == in_dim, (K, in_dim)

    # BN(eval, running stats) as an affine epilogue — W itself is untouched.
    f32 = jnp.float32
    scale = gamma.astype(f32) * lax.rsqrt(running_var.astype(f32) + eps)
    bias = (b.astype(f32) * scale
            + beta.astype(f32) - running_mean.astype(f32) * scale)

    if compute_dtype is None:
        compute_dtype = x.dtype
    x_c = x.astype(compute_dtype)
    w_c = w.astype(compute_dtype)
    in_elt = jnp.dtype(compute_dtype).itemsize
    out_dtype = x.dtype
    out_elt = jnp.dtype(out_dtype).itemsize

    # Sublane multiple: 16 for packed bf16 rows, 8 for f32.
    sub = 16 if in_elt == 2 else 8

    # ---- tile selection (always rounded to legal multiples) ----
    tb = _round_up(max(int(tb), sub), sub)
    tb = min(tb, _round_up(B, sub))
    tn, Np = _pick_tn(out_dim, int(tn))

    vmem_cap = _vmem_capacity_bytes()
    vmem_cap_limit = (vmem_cap * 3) // 4           # ~48 MiB v7x, ~96 MiB v5e/v6e

    def footprint(tb_, tn_):
        return (2 * tb_ * K * in_elt               # x tiles (double-buffered)
                + 2 * K * tn_ * in_elt             # W tiles
                + 4 * tn_ * 4                      # scale + bias rows
                + 2 * tb_ * tn_ * out_elt)         # output tiles

    # Shrink tiles until the double-buffered footprint fits the VMEM budget.
    for _ in range(32):
        if footprint(tb, tn) <= vmem_cap_limit:
            break
        if tb > sub and tb >= tn:
            tb = max(sub, (tb // 2 // sub) * sub)
        elif tn > 128:
            new_tn, new_np = _pick_tn(out_dim, tn // 2)
            if new_tn >= tn:
                break
            tn, Np = new_tn, new_np
        else:
            break
    # TODO(synk): an extremely large in_dim (single W column block > VMEM
    # budget) would need a K-tiled accumulator fallback; typical MFC dims
    # (<= a few thousand) never hit this.

    # ---- padding (K is never padded; N only if no clean divisor exists) ----
    Bp = _round_up(B, tb)
    if Bp != B:
        x_c = jnp.pad(x_c, ((0, Bp - B), (0, 0)))
    if Np != out_dim:
        w_c = jnp.pad(w_c, ((0, 0), (0, Np - out_dim)))
        scale = jnp.pad(scale, (0, Np - out_dim))
        bias = jnp.pad(bias, (0, Np - out_dim))
    scale2 = scale.reshape(1, Np)
    bias2 = bias.reshape(1, Np)

    num_m = Bp // tb
    num_n = Np // tn
    # N outermost: the W block's index map is constant across the inner M loop,
    # so each W block is DMA'd from HBM exactly once.
    grid = (num_n, num_m)

    cost = pl.CostEstimate(
        flops=2 * Bp * K * Np,
        transcendentals=0,
        bytes_accessed=(Bp * K * in_elt + K * Np * in_elt
                        + 2 * Np * 4 + Bp * Np * out_elt))

    vmem_limit = int(min(max(2 * footprint(tb, tn), 32 << 20), vmem_cap_limit))

    out = pl.pallas_call(
        mfc_kernel,
        out_shape=jax.ShapeDtypeStruct((Bp, Np), out_dtype),
        grid_spec=pltpu.PrefetchScalarGridSpec(
            num_scalar_prefetch=0,
            grid=grid,
            in_specs=[
                pl.BlockSpec((tb, K), lambda j, i: (i, 0)),   # x row block (full K)
                pl.BlockSpec((K, tn), lambda j, i: (0, j)),   # W col block (resident over i)
                pl.BlockSpec((1, tn), lambda j, i: (0, j)),   # BN scale
                pl.BlockSpec((1, tn), lambda j, i: (0, j)),   # fused bias
            ],
            out_specs=pl.BlockSpec((tb, tn), lambda j, i: (i, j)),
        ),
        compiler_params=pltpu.CompilerParams(
            dimension_semantics=("parallel", "parallel"),
            vmem_limit_bytes=vmem_limit),
        cost_estimate=cost,
    )(x_c, w_c, scale2, bias2)

    # TODO(synk): nn.Dropout is identity in eval mode; training-mode random
    # masking is intentionally omitted.
    if Bp != B or Np != out_dim:
        out = out[:B, :out_dim]
    return out


def init_params(key, in_dim, out_dim):
    """Deterministic init matching MFC.__init__ / xavier_init_fc shapes."""
    k_w, k_g, k_bt, k_m, k_v = jax.random.split(key, 5)
    # xavier_init_fc: uniform(-r, r), r = sqrt(6) / sqrt(in + out); bias = 0.
    r = jnp.sqrt(6.0) / jnp.sqrt(float(in_dim + out_dim))
    # PyTorch Linear weight is (out, in); stored as (in, out) for x @ W.
    w = jax.random.uniform(k_w, (in_dim, out_dim), jnp.float32, -r, r)
    b = jnp.zeros((out_dim,), jnp.float32)
    # BatchNorm1d params (non-default values so the BN path is exercised).
    gamma = 1.0 + 0.1 * jax.random.normal(k_g, (out_dim,), jnp.float32)
    beta = 0.1 * jax.random.normal(k_bt, (out_dim,), jnp.float32)
    running_mean = 0.05 * jax.random.normal(k_m, (out_dim,), jnp.float32)
    running_var = 1.0 + 0.1 * jax.random.uniform(k_v, (out_dim,), jnp.float32)
    return w, b, gamma, beta, running_mean, running_var


def mfc_reference(x, w, b, gamma, beta, mean, var, eps=1e-5):
    y = x @ w + b
    return gamma * (y - mean) / jnp.sqrt(var + eps) + beta


if __name__ == "__main__":
    key = jax.random.PRNGKey(0)
    k_x, k_p = jax.random.split(key)

    B, in_dim, out_dim = 16, 32, 64
    x = jax.random.normal(k_x, (B, in_dim), jnp.float32)
    params = init_params(k_p, in_dim, out_dim)

    ref = mfc_reference(x, *params)

    # Full-precision compute path (tight tolerance).
    out_f32 = jax.block_until_ready(
        mfc_forward(x, *params, compute_dtype=jnp.float32))
    assert out_f32.shape == (B, out_dim), out_f32.shape
    assert jnp.allclose(out_f32, ref, atol=1e-4, rtol=1e-4), (
        float(jnp.max(jnp.abs(out_f32 - ref))))

    # Default bf16 inference path (f32 accumulation + f32 BN epilogue).
    out_bf16 = jax.block_until_ready(mfc_forward(x, *params))
    assert out_bf16.shape == (B, out_dim), out_bf16.shape
    assert jnp.allclose(out_bf16, ref, atol=5e-2, rtol=5e-2), (
        float(jnp.max(jnp.abs(out_bf16 - ref))))

    print("KERNEL_OK")
</pallas_src>

<mosaic_0001>
module attributes {stable_mosaic.version = 11 : i64} {
  func.func @mfc_kernel(%arg0: i32, %arg1: i32, %arg2: memref<16x32xf32, #tpu.memory_space<vmem>>, %arg3: memref<32x64xf32, #tpu.memory_space<vmem>>, %arg4: memref<1x64xf32, #tpu.memory_space<vmem>>, %arg5: memref<1x64xf32, #tpu.memory_space<vmem>>, %arg6: memref<16x64xf32, #tpu.memory_space<vmem>>) attributes {dimension_semantics = [#tpu.dimension_semantics<parallel>, #tpu.dimension_semantics<parallel>], iteration_bounds = array<i64: 1, 1>, scalar_prefetch = 0 : i64, scratch_operands = 0 : i64, tpu.core_type = #tpu.core_type<tc>, window_params = [{transform_indices = @transform_0, window_bounds = array<i64: 16, 32>}, {transform_indices = @transform_1, window_bounds = array<i64: 32, 64>}, {transform_indices = @transform_2, window_bounds = array<i64: 1, 64>}, {transform_indices = @transform_3, window_bounds = array<i64: 1, 64>}, {transform_indices = @transform_4, window_bounds = array<i64: 16, 64>}]} {
    %c0 = arith.constant 0 : index
    %c0_0 = arith.constant 0 : index
    %0 = vector.load %arg2[%c0, %c0_0] : memref<16x32xf32, #tpu.memory_space<vmem>>, vector<16x32xf32>
    %c0_1 = arith.constant 0 : index
    %c0_2 = arith.constant 0 : index
    %1 = vector.load %arg3[%c0_1, %c0_2] : memref<32x64xf32, #tpu.memory_space<vmem>>, vector<32x64xf32>
    %cst = arith.constant dense<0.000000e+00> : vector<16x64xf32>
    %2 = tpu.matmul %0, %1, %cst {dimension_numbers = #tpu.dot_dimension_numbers<[1], [0], [0], [1], [0, 0, 1, 1], [], []>} : vector<16x32xf32>, vector<32x64xf32>, vector<16x64xf32> -> vector<16x64xf32>
    %c0_3 = arith.constant 0 : index
    %c0_4 = arith.constant 0 : index
    %3 = vector.load %arg4[%c0_3, %c0_4] : memref<1x64xf32, #tpu.memory_space<vmem>>, vector<1x64xf32>
    %4 = vector.broadcast %3 : vector<1x64xf32> to vector<16x64xf32>
    %5 = arith.mulf %2, %4 : vector<16x64xf32>
    %c0_5 = arith.constant 0 : index
    %c0_6 = arith.constant 0 : index
    %6 = vector.load %arg5[%c0_5, %c0_6] : memref<1x64xf32, #tpu.memory_space<vmem>>, vector<1x64xf32>
    %7 = vector.broadcast %6 : vector<1x64xf32> to vector<16x64xf32>
    %8 = arith.addf %5, %7 : vector<16x64xf32>
    %c0_7 = arith.constant 0 : index
    %c0_8 = arith.constant 0 : index
    %9 = vector.load %arg6[%c0_7, %c0_8] : memref<16x64xf32, #tpu.memory_space<vmem>>, vector<16x64xf32>
    tpu.vector_store %arg6[%c0_7, %c0_8], %8 {strides = array<i32>} : memref<16x64xf32, #tpu.memory_space<vmem>>, vector<16x64xf32>,
    return
  }
  func.func @transform_0(%arg0: i32, %arg1: i32) -> (i32, i32) {
    %c0_i32 = arith.constant 0 : i32
    %c0_i32_0 = arith.constant 0 : i32
    return %arg1, %c0_i32 : i32, i32
  }
  func.func @transform_1(%arg0: i32, %arg1: i32) -> (i32, i32) {
    %c0_i32 = arith.constant 0 : i32
    %c0_i32_0 = arith.constant 0 : i32
    return %c0_i32, %arg0 : i32, i32
  }
  func.func @transform_2(%arg0: i32, %arg1: i32) -> (i32, i32) {
    %c0_i32 = arith.constant 0 : i32
    %c0_i32_0 = arith.constant 0 : i32
    return %c0_i32, %arg0 : i32, i32
  }
  func.func @transform_3(%arg0: i32, %arg1: i32) -> (i32, i32) {
    %c0_i32 = arith.constant 0 : i32
    %c0_i32_0 = arith.constant 0 : i32
    return %c0_i32, %arg0 : i32, i32
  }
  func.func @transform_4(%arg0: i32, %arg1: i32) -> (i32, i32) {
    %c0_i32 = arith.constant 0 : i32
    return %arg1, %arg0 : i32, i32
  }
}

</mosaic_0001>

<llo_original>
// kernel: tpu_custom_call.1
$region0: #{tpu_custom_call.1}
  #allocation0 [shape = 'u32[]', space=smem, size = 0x4, offset = 0x4, fixed_abs, tag = 'smem constant byte address 0x4 - core index']
  #allocation1 [shape = 'u32[144,128]{1,0:T(1,128)}', space=vmem, size = 0x12000, scoped, tag = 'internal scratch']
  %s0 = inlined_call_operand.hbm [shape: f32[16,32], index: 0, kind: input, shape index: {}]
  %s1 = inlined_call_operand.hbm [shape: f32[32,64], index: 1, kind: input, shape index: {}]
  %s2 = inlined_call_operand.vmem [shape: f32[1,64], index: 2, kind: input, shape index: {}]
  %s3 = inlined_call_operand.vmem [shape: f32[1,64], index: 3, kind: input, shape index: {}]
  %s4 = inlined_call_operand.hbm [shape: f32[16,64], index: 4, kind: output, shape index: {}]
  %s5 = sld [smem:[#allocation0]]
  $region34: #{tpu_custom_call.1} parent=0
    _
  %s7 = ssub.s32 1, %s5
  %s8 = scalar_select 0, %s7, %s5
  $region1: #{tpu_custom_call.1} parent=0
    #allocation2 [shape = 'u8[8192]{0}', space=vmem, size = 0x2000, scoped, tag = 'input window, operand 0, single buffered']
    #allocation3 [shape = 's32[1]{0}', space=sflag, size = 0x4, scoped, tag = 'scoped memory for tpu_custom_call.1']
    #allocation4 [shape = 's32[1]{0}', space=sflag, size = 0x4, scoped, tag = 'scoped memory for tpu_custom_call.1']
    #allocation5 [shape = 'u8[16384]{0}', space=vmem, size = 0x4000, scoped, tag = 'input window, operand 1, single buffered']
    #allocation6 [shape = 's32[1]{0}', space=sflag, size = 0x4, scoped, tag = 'scoped memory for tpu_custom_call.1']
    #allocation7 [shape = 'u8[8192]{0}', space=vmem, size = 0x2000, scoped, tag = 'output window, operand 0, single buffered']
    %9 = vsyncpa [#allocation3], 0
    %10 = vsyncpa [#allocation6], 0
    %11 = vsyncpa [#allocation4], 0
    // Predicated region
    $region2: #{tpu_custom_call.1} parent=1 // pred_check
      _
    $region3: #{tpu_custom_call.1} parent=1 // pred_check_branch
      %13 = sbr.rel (0) target = $region5
    $region4: #{tpu_custom_call.1} parent=1 // pred_region
      %s15 = ssub.s32 256, 256
      %16 = vsyncadd [#allocation3], %s15
      %s17 = sshll.u32 [#allocation2], 4
      %s18 = int_to_ptr.vmem [resolvable:$true] %s17
      %23 = dma.hbm_to_vmem [thread:$0]  %s0, 256, %s18, [#allocation3], 128, 128, 8
    $region5: #{tpu_custom_call.1} parent=1 // pred_fallthru
      _
    // Predicated region
    $region6: #{tpu_custom_call.1} parent=1 // pred_check
      _
    $region7: #{tpu_custom_call.1} parent=1 // pred_check_branch
      %25 = sbr.rel (0) target = $region9
    $region8: #{tpu_custom_call.1} parent=1 // pred_region
      %s27 = ssub.s32 512, 512
      %28 = vsyncadd [#allocation6], %s27
      %s29 = sshll.u32 [#allocation5], 4
      %s30 = int_to_ptr.vmem [resolvable:$true] %s29
      %35 = dma.hbm_to_vmem [thread:$0]  %s1, 512, %s30, [#allocation6], 128, 128, 8
    $region9: #{tpu_custom_call.1} parent=1 // pred_fallthru
      _
    // Predicated region
    $region10: #{tpu_custom_call.1} parent=1 // pred_check
      _
    $region11: #{tpu_custom_call.1} parent=1 // pred_check_branch
      %37 = sbr.rel (0) target = $region13
    $region12: #{tpu_custom_call.1} parent=1 // pred_region
      _
    $region13: #{tpu_custom_call.1} parent=1 // pred_fallthru
      _
    // Predicated region
    $region14: #{tpu_custom_call.1} parent=1 // pred_check
      _
    $region15: #{tpu_custom_call.1} parent=1 // pred_check_branch
      %39 = sbr.rel (0) target = $region17
    $region16: #{tpu_custom_call.1} parent=1 // pred_region
      _
    $region17: #{tpu_custom_call.1} parent=1 // pred_fallthru
      _
    // Predicated region
    $region18: #{tpu_custom_call.1} parent=1 // pred_check
      _
    $region19: #{tpu_custom_call.1} parent=1 // pred_check_branch
      %41 = sbr.rel (0) target = $region21
    $region20: #{tpu_custom_call.1} parent=1 // pred_region
      %42 = dma.done [#allocation3], 256
    $region21: #{tpu_custom_call.1} parent=1 // pred_fallthru
      _
    // Predicated region
    $region22: #{tpu_custom_call.1} parent=1 // pred_check
      _
    $region23: #{tpu_custom_call.1} parent=1 // pred_check_branch
      %44 = sbr.rel (0) target = $region25
    $region24: #{tpu_custom_call.1} parent=1 // pred_region
      %45 = dma.done [#allocation6], 512
    $region25: #{tpu_custom_call.1} parent=1 // pred_fallthru
      _
    %v46 = vld [vmem:[#allocation2] sm:$0xff]
    %v47 = vld [vmem:[#allocation2 + $0x8] sm:$0xff]
    %v48 = vld [vmem:[#allocation5] sm:$0xff]
    %v49 = vld [vmem:[#allocation5 + $0x8] sm:$0xff]
    %v50 = vld [vmem:[#allocation5 + $0x10] sm:$0xff]
    %v51 = vld [vmem:[#allocation5 + $0x18] sm:$0xff]
    %vm52 = vcmask 261120
    %v54 = vsel %vm52, %v46, 0
    %v57 = vsel %vm52, %v47, 0
    %59 = vmatprep.subr.mxu0 0.0
    %60 = vmatpush1.msra.mxu0 0.0
    %61 = vmatprep.subr.mxu0 0.0
    %62 = vmatpush1.msra.mxu0 0.0
    %63 = vmatprep.subr.mxu0 0.0
    %64 = vmatpush1.msra.mxu0 0.0
    %65 = vmatprep.subr.mxu0 0.0
    %66 = vmatpush1.msra.mxu0 0.0
    %67 = vmatprep.subr.mxu0 0.0
    %68 = vmatpush1.msra.mxu0 0.0
    %69 = vmatprep.subr.mxu0 0.0
    %70 = vmatpush1.msra.mxu0 0.0
    %71 = vmatprep.subr.mxu0 0.0
    %72 = vmatpush1.msra.mxu0 0.0
    %73 = vmatprep.subr.mxu0 0.0
    %74 = vmatpush1.msra.mxu0 0.0
    %75 = vmatprep.subr.mxu0 0.0
    %76 = vmatpush1.msra.mxu0 0.0
    %77 = vmatprep.subr.mxu0 0.0
    %78 = vmatpush1.msra.mxu0 0.0
    %79 = vmatprep.subr.mxu0 0.0
    %80 = vmatpush1.msra.mxu0 0.0
    %81 = vmatprep.subr.mxu0 0.0
    %82 = vmatpush1.msra.mxu0 0.0
    %83 = vmatprep.subr.mxu0 0.0
    %84 = vmatpush1.msra.mxu0 %v51
    %85 = vmatprep.subr.mxu0 0.0
    %86 = vmatpush1.msra.mxu0 %v50
    %87 = vmatprep.subr.mxu0 0.0
    %88 = vmatpush1.msra.mxu0 %v49
    %89 = vmatprep.subr.mxu0 0.0
    %90 = vmatpush1.msra.mxu0 %v48
    %91 = vmatprep.subr.mxu0 0.0
    %92 = vmatpush2.msra.mxu0 0.0
    %93 = vmatprep.subr.mxu0 0.0
    %94 = vmatpush2.msra.mxu0 0.0
    %95 = vmatprep.subr.mxu0 0.0
    %96 = vmatpush2.msra.mxu0 0.0
    %97 = vmatprep.subr.mxu0 0.0
    %98 = vmatpush2.msra.mxu0 0.0
    %99 = vmatprep.subr.mxu0 0.0
    %100 = vmatpush2.msra.mxu0 0.0
    %101 = vmatprep.subr.mxu0 0.0
    %102 = vmatpush2.msra.mxu0 0.0
    %103 = vmatprep.subr.mxu0 0.0
    %104 = vmatpush2.msra.mxu0 0.0
    %105 = vmatprep.subr.mxu0 0.0
    %106 = vmatpush2.msra.mxu0 0.0
    %107 = vmatprep.subr.mxu0 0.0
    %108 = vmatpush2.msra.mxu0 0.0
    %109 = vmatprep.subr.mxu0 0.0
    %110 = vmatpush2.msra.mxu0 0.0
    %111 = vmatprep.subr.mxu0 0.0
    %112 = vmatpush2.msra.mxu0 0.0
    %113 = vmatprep.subr.mxu0 0.0
    %114 = vmatpush2.msra.mxu0 0.0
    %115 = vmatprep.subr.mxu0 0.0
    %116 = vmatpush2.msra.mxu0 0.0
    %117 = vmatprep.subr.mxu0 0.0
    %118 = vmatpush2.msra.mxu0 0.0
    %119 = vmatprep.subr.mxu0 0.0
    %120 = vmatpush2.msra.mxu0 0.0
    %121 = vmatprep.subr.mxu0 0.0
    %122 = vmatpush2.msra.mxu0 0.0
    %123 = vmatprep.mubr.f32.mxu0 0.0
    %124 = vmatmul.mubr.f32.gmra.mxu0 %v54
    %v125 = vpop.f32.mrf.mxu0
    %v126 = vadd.f32 0.0, %v125
    %v127 = vpop.f32.mrf.mxu0
    %128 = vmatprep.mubr.f32.mxu0 0.0
    %129 = vmatmul.mubr.f32.gmra.mxu0 %v57
    %v130 = vpop.f32.mrf.mxu0
    %v131 = vadd.f32 0.0, %v130
    %v132 = vpop.f32.mrf.mxu0
    %133 = vdwg.mxu0
    %v134 = vld [vmem:[%s2] sm:$0x1]
    %v136 = vlaneseq
    %v137 = vshrl.u32 %v136, 7
    %v138 = vsub.s32 0, %v137
    %v139 = vrot.slane %v134, %v138
    %v141 = vmul.f32 %v126, %v139
    %v142 = vmul.f32 %v131, %v139
    %v143 = vld [vmem:[%s3] sm:$0x1]
    %v145 = vlaneseq
    %v146 = vshrl.u32 %v145, 7
    %v147 = vsub.s32 0, %v146
    %v148 = vrot.slane %v143, %v147
    %v150 = vadd.f32 %v141, %v148
    %v151 = vadd.f32 %v142, %v148
    %vm152 = vcmask 523264
    %153 = vst.msk [vmem:[#allocation7] sm:$0xff] %vm152, %v150
    %154 = vst.msk [vmem:[#allocation7 + $0x8] sm:$0xff] %vm152, %v151
    // Predicated region
    $region26: #{tpu_custom_call.1} parent=1 // pred_check
      _
    $region27: #{tpu_custom_call.1} parent=1 // pred_check_branch
      %156 = sbr.rel (0) target = $region29
    $region28: #{tpu_custom_call.1} parent=1 // pred_region
      %s158 = ssub.s32 256, 256
      %159 = vsyncadd [#allocation4], %s158
      %s160 = sshll.u32 [#allocation7], 4
      %s161 = int_to_ptr.vmem [resolvable:$true] %s160
      %166 = dma.vmem_to_hbm [thread:$0]  %s161, 256, %s4, [#allocation4], 128, 128, 8
    $region29: #{tpu_custom_call.1} parent=1 // pred_fallthru
      _
    // Predicated region
    $region30: #{tpu_custom_call.1} parent=1 // pred_check
      _
    $region31: #{tpu_custom_call.1} parent=1 // pred_check_branch
      %168 = sbr.rel (0) target = $region33
    $region32: #{tpu_custom_call.1} parent=1 // pred_region
      %169 = dma.done [#allocation4], 256
    $region33: #{tpu_custom_call.1} parent=1 // pred_fallthru
      _
    %170 = vsyncpa [#allocation3], 1
    %171 = vsyncpa [#allocation6], 1
    %172 = vsyncpa [#allocation4], 1

</llo_original>
